<compile_context>
chip_gen: v5e
topology: v5e:2x2
jax: 0.10.0
libtpu: 0.0.40
codegen_flags: <defaults>
</compile_context>

<pallas_src>
import math

import jax
import jax.numpy as jnp
from jax.experimental import pallas as pl
from jax.experimental.pallas import tpu as pltpu


def _round_up(x, m):
    return ((x + m - 1) // m) * m


# ----------------------------------------------------------------------------
# Pallas kernel: per-tile patch projection + positional embedding
# ----------------------------------------------------------------------------
def _vision_embed_kernel(patches_ref, w_ref, pos_ref, out_ref):
    # patches_ref: (tb, Ns, Kp) bf16 -- row 0 of each batch element is an
    #                                   all-zero CLS row; rows 1..N are the
    #                                   flattened patches; the rest is padding.
    # w_ref:       (Kp, Ep)     bf16 -- conv weight as a projection matrix.
    # pos_ref:     (Ns, Ep)     f32  -- row 0 = pos_embed[0]; rows 1..N =
    #                                   pos_embed[1:] + conv bias; rest zero.
    # out_ref:     (tb, N+1, Ep)
    tb, ns, kp = patches_ref.shape
    ep = w_ref.shape[1]
    n_out = out_ref.shape[1]
    # Fold the tile's batch dim into the matmul M axis: one big MXU matmul.
    lhs = patches_ref[...].reshape(tb * ns, kp)
    proj = jnp.dot(lhs, w_ref[...], preferred_element_type=jnp.float32)
    # Row 0 of proj is exactly zero (zero CLS row), so adding pos yields the
    # CLS token directly; rows 1..N get pos + bias. One fused add, one
    # whole-ref, sublane-aligned (offset-0) store.
    y = proj.reshape(tb, ns, ep) + pos_ref[...][None, :, :]
    out_ref[...] = y[:, :n_out, :].astype(out_ref.dtype)


def vision_embedding_forward(x, weight, bias, pos_embed, patch_size,
                             out_dtype=jnp.float32):
    """x: (B, C, H, W) float32 (NCHW, as in PyTorch).
    weight: (E, C, p, p), bias: (E,), pos_embed: (N+1, E).
    Returns (B, N+1, E) in out_dtype (float32 by default, matching the module)."""
    B, C, H, W = x.shape
    E = weight.shape[0]
    p = patch_size
    Hp, Wp = H // p, W // p
    N = Hp * Wp
    K = C * p * p

    # Lane/sublane-aligned sizes. Ns includes the prepended CLS row.
    Kp = _round_up(K, 128)
    Ep = _round_up(E, 128)
    Ns = _round_up(N + 1, 8)
    out_itemsize = jnp.dtype(out_dtype).itemsize

    # ------------- per-generation VMEM budgeting & tb selection -------------
    try:
        vmem_cap = int(pltpu.get_tpu_info().vmem_capacity_bytes)
    except Exception:
        vmem_cap = 64 << 20  # conservative (v7x) fallback

    def _block_vmem_bytes(tb):
        patches_blk = tb * Ns * Kp * 2               # bf16
        w_blk = Kp * Ep * 2                          # bf16
        pos_blk = Ns * Ep * 4                        # f32
        out_blk = tb * (N + 1) * Ep * out_itemsize
        return 2 * (patches_blk + w_blk + pos_blk + out_blk)  # double-buffered

    vmem_budget = int(vmem_cap * 0.55)               # headroom for scratch
    target_m = 2048                                  # MXU M rows per grid step
    tb = max(1, min(B, target_m // max(Ns, 1)))
    while tb > 1 and _block_vmem_bytes(tb) > vmem_budget:
        tb -= 1
    if B >= 2:
        tb = min(tb, (B + 1) // 2)                   # keep >= 2 grid steps
    n_blocks = (B + tb - 1) // tb
    Bp = n_blocks * tb                               # padded batch
    vmem_limit = int(min(vmem_cap,
                         max(32 << 20, _block_vmem_bytes(tb) + (8 << 20))))

    # ------------- host-side layout glue (fuses under jit) ------------------
    # im2col: flatten each patch in (C, kh, kw) order to match the Conv2d
    # weight flattening. Cast to bf16 first so the transpose copy moves half
    # the bytes. A single jnp.pad then prepends the zero CLS row and pads the
    # batch / sequence / K dims to aligned sizes.
    # TODO(synk): move the patch gather fully into the kernel
    # (memory_space=pl.ANY + strided copies) to remove this HBM round trip.
    patches = x.astype(jnp.bfloat16).reshape(B, C, Hp, p, Wp, p)
    patches = patches.transpose(0, 2, 4, 1, 3, 5).reshape(B, N, K)
    patches = jnp.pad(patches, ((0, Bp - B), (1, Ns - 1 - N), (0, Kp - K)))

    w_mat = weight.reshape(E, K).T.astype(jnp.bfloat16)          # (K, E)
    w_mat = jnp.pad(w_mat, ((0, Kp - K), (0, Ep - E)))

    # Positional table with the conv bias folded into the patch rows; row 0
    # stays plain pos_embed[0] (CLS token = zeros + pos_embed[0]).
    pos_full = jnp.concatenate(
        [pos_embed[0:1, :], pos_embed[1:, :] + bias[None, :]], axis=0)
    pos_full = jnp.pad(pos_full.astype(jnp.float32),
                       ((0, Ns - (N + 1)), (0, Ep - E)))

    out = pl.pallas_call(
        _vision_embed_kernel,
        out_shape=jax.ShapeDtypeStruct((Bp, N + 1, Ep), out_dtype),
        grid_spec=pltpu.PrefetchScalarGridSpec(
            num_scalar_prefetch=0,
            grid=(n_blocks,),
            in_specs=[
                pl.BlockSpec((tb, Ns, Kp), lambda b: (b, 0, 0)),
                pl.BlockSpec((Kp, Ep), lambda b: (0, 0)),
                pl.BlockSpec((Ns, Ep), lambda b: (0, 0)),
            ],
            out_specs=pl.BlockSpec((tb, N + 1, Ep), lambda b: (b, 0, 0)),
        ),
        compiler_params=pltpu.CompilerParams(
            dimension_semantics=("parallel",),
            vmem_limit_bytes=vmem_limit),
    )(patches, w_mat, pos_full)

    if Bp != B or Ep != E:
        out = out[:B, :, :E]
    return out


# ----------------------------------------------------------------------------
# Parameter construction (deterministic, mirrors nn.Module __init__)
# ----------------------------------------------------------------------------
def make_params(img_size, in_channels, embedding_size, patch_size, key):
    assert img_size % patch_size == 0
    num_patches = (img_size // patch_size) ** 2

    # Conv2d(in_channels, embedding_size, kernel_size=patch_size, stride=patch_size)
    k_w, k_b = jax.random.split(key)
    fan_in = in_channels * patch_size * patch_size
    bound = 1.0 / math.sqrt(fan_in)
    weight = jax.random.uniform(
        k_w, (embedding_size, in_channels, patch_size, patch_size),
        minval=-bound, maxval=bound, dtype=jnp.float32)
    bias = jax.random.uniform(
        k_b, (embedding_size,), minval=-bound, maxval=bound, dtype=jnp.float32)

    # Sinusoidal positional embedding, same formula as the module.
    pos = jnp.arange(0, num_patches + 1, dtype=jnp.float32)[:, None]     # (N+1, 1)
    ia = jnp.exp(jnp.arange(0, embedding_size, 2, dtype=jnp.float32)
                 * (-math.log(10000.0) / embedding_size))[None, :]        # (1, E/2)
    angles = pos @ ia                                                     # (N+1, E/2)
    pos_embed = jnp.zeros((num_patches + 1, embedding_size), jnp.float32)
    pos_embed = pos_embed.at[:, 0::2].set(
        jnp.sin(angles)[:, : embedding_size // 2 + 1][:, : (embedding_size + 1) // 2])
    pos_embed = pos_embed.at[:, 1::2].set(
        jnp.cos(angles)[:, : embedding_size // 2])
    return weight, bias, pos_embed


# ----------------------------------------------------------------------------
# References for correctness checking
# ----------------------------------------------------------------------------
def reference_forward(x, weight, bias, pos_embed, patch_size):
    """Full-f32 conv reference (the PyTorch semantics)."""
    y = jax.lax.conv_general_dilated(
        x, weight,
        window_strides=(patch_size, patch_size), padding="VALID",
        dimension_numbers=("NCHW", "OIHW", "NCHW"))
    y = y + bias[None, :, None, None]
    B, E, Hp, Wp = y.shape
    y = y.reshape(B, E, Hp * Wp).transpose(0, 2, 1)                 # (B, N, E)
    cls = jnp.zeros((B, 1, E), jnp.float32)
    y = jnp.concatenate([cls, y], axis=1)
    return y + pos_embed[None]


def emulated_reference(x, weight, bias, pos_embed, patch_size):
    """Same math as the kernel (bf16-rounded operands, f32 accumulation)."""
    B, C, H, W = x.shape
    E = weight.shape[0]
    p = patch_size
    Hp, Wp = H // p, W // p
    N = Hp * Wp
    K = C * p * p
    patches = x.reshape(B, C, Hp, p, Wp, p).transpose(0, 2, 4, 1, 3, 5)
    patches = patches.reshape(B, N, K).astype(jnp.bfloat16).astype(jnp.float32)
    w_mat = weight.reshape(E, K).T.astype(jnp.bfloat16).astype(jnp.float32)
    proj = jnp.einsum("bnk,ke->bne", patches, w_mat) + bias[None, None, :]
    cls = jnp.zeros((B, 1, E), jnp.float32)
    return jnp.concatenate([cls, proj], axis=1) + pos_embed[None]


if __name__ == "__main__":
    img_size = 16
    in_channels = 4
    embedding_size = 32
    patch_size = 4
    batch = 2

    key = jax.random.PRNGKey(0)
    k_params, k_x = jax.random.split(key)
    weight, bias, pos_embed = make_params(
        img_size, in_channels, embedding_size, patch_size, k_params)
    x = jax.random.normal(k_x, (batch, in_channels, img_size, img_size),
                          dtype=jnp.float32)

    fwd = jax.jit(vision_embedding_forward,
                  static_argnames=("patch_size", "out_dtype"))
    out = fwd(x, weight, bias, pos_embed, patch_size=patch_size)
    out = jax.block_until_ready(out)

    N = (img_size // patch_size) ** 2
    assert out.shape == (batch, N + 1, embedding_size)
    assert out.dtype == jnp.float32

    # Tight check against an exact emulation of the kernel's bf16 matmul.
    ref_bf16 = emulated_reference(x, weight, bias, pos_embed, patch_size)
    assert jnp.allclose(out, ref_bf16, atol=2e-3, rtol=2e-3), \
        f"max err vs bf16 reference {jnp.max(jnp.abs(out - ref_bf16))}"

    # Loose sanity check against the full-f32 conv reference (bf16 operands
    # make the result slightly off the f32 path, as expected).
    ref_f32 = reference_forward(x, weight, bias, pos_embed, patch_size)
    assert jnp.allclose(out, ref_f32, atol=5e-2, rtol=5e-2), \
        f"max err vs f32 reference {jnp.max(jnp.abs(out - ref_f32))}"

    print("KERNEL_OK")
</pallas_src>

<mosaic_0001>
module attributes {stable_mosaic.version = 11 : i64} {
  func.func @_vision_embed_kernel(%arg0: i32, %arg1: memref<1x24x128xbf16, #tpu.memory_space<vmem>>, %arg2: memref<128x128xbf16, #tpu.memory_space<vmem>>, %arg3: memref<24x128xf32, #tpu.memory_space<vmem>>, %arg4: memref<1x17x128xf32, #tpu.memory_space<vmem>>) attributes {dimension_semantics = [#tpu.dimension_semantics<parallel>], iteration_bounds = array<i64: 2>, scalar_prefetch = 0 : i64, scratch_operands = 0 : i64, tpu.core_type = #tpu.core_type<tc>, window_params = [{transform_indices = @transform_0, window_bounds = array<i64: 1, 24, 128>}, {pipeline_mode = #tpu.pipeline_mode<synchronous>, transform_indices = @transform_1, window_bounds = array<i64: 128, 128>}, {pipeline_mode = #tpu.pipeline_mode<synchronous>, transform_indices = @transform_2, window_bounds = array<i64: 24, 128>}, {transform_indices = @transform_3, window_bounds = array<i64: 1, 17, 128>}]} {
    %c0 = arith.constant 0 : index
    %c0_0 = arith.constant 0 : index
    %c0_1 = arith.constant 0 : index
    %0 = vector.load %arg1[%c0, %c0_0, %c0_1] : memref<1x24x128xbf16, #tpu.memory_space<vmem>>, vector<1x24x128xbf16>
    %1 = vector.shape_cast %0 : vector<1x24x128xbf16> to vector<24x128xbf16>
    %c0_2 = arith.constant 0 : index
    %c0_3 = arith.constant 0 : index
    %2 = vector.load %arg2[%c0_2, %c0_3] : memref<128x128xbf16, #tpu.memory_space<vmem>>, vector<128x128xbf16>
    %cst = arith.constant dense<0.000000e+00> : vector<24x128xf32>
    %3 = tpu.matmul %1, %2, %cst {dimension_numbers = #tpu.dot_dimension_numbers<[1], [0], [0], [1], [0, 0, 1, 1], [], []>} : vector<24x128xbf16>, vector<128x128xbf16>, vector<24x128xf32> -> vector<24x128xf32>
    %4 = vector.shape_cast %3 : vector<24x128xf32> to vector<1x24x128xf32>
    %c0_4 = arith.constant 0 : index
    %c0_5 = arith.constant 0 : index
    %5 = vector.load %arg3[%c0_4, %c0_5] : memref<24x128xf32, #tpu.memory_space<vmem>>, vector<24x128xf32>
    %6 = vector.shape_cast %5 : vector<24x128xf32> to vector<1x24x128xf32>
    %7 = arith.addf %4, %6 : vector<1x24x128xf32>
    %8 = vector.extract_strided_slice %7 {offsets = [0, 0, 0], sizes = [1, 17, 128], strides = [1, 1, 1]} : vector<1x24x128xf32> to vector<1x17x128xf32>
    %c0_6 = arith.constant 0 : index
    %c0_7 = arith.constant 0 : index
    %c0_8 = arith.constant 0 : index
    %9 = vector.load %arg4[%c0_6, %c0_7, %c0_8] : memref<1x17x128xf32, #tpu.memory_space<vmem>>, vector<1x17x128xf32>
    tpu.vector_store %arg4[%c0_6, %c0_7, %c0_8], %8 {strides = array<i32>} : memref<1x17x128xf32, #tpu.memory_space<vmem>>, vector<1x17x128xf32>,
    return
  }
  func.func @transform_0(%arg0: i32) -> (i32, i32, i32) {
    %c0_i32 = arith.constant 0 : i32
    %c0_i32_0 = arith.constant 0 : i32
    %c0_i32_1 = arith.constant 0 : i32
    return %arg0, %c0_i32, %c0_i32_0 : i32, i32, i32
  }
  func.func @transform_1(%arg0: i32) -> (i32, i32) {
    %c0_i32 = arith.constant 0 : i32
    %c0_i32_0 = arith.constant 0 : i32
    %c0_i32_1 = arith.constant 0 : i32
    return %c0_i32, %c0_i32_0 : i32, i32
  }
  func.func @transform_2(%arg0: i32) -> (i32, i32) {
    %c0_i32 = arith.constant 0 : i32
    %c0_i32_0 = arith.constant 0 : i32
    %c0_i32_1 = arith.constant 0 : i32
    return %c0_i32, %c0_i32_0 : i32, i32
  }
  func.func @transform_3(%arg0: i32) -> (i32, i32, i32) {
    %c0_i32 = arith.constant 0 : i32
    %c0_i32_0 = arith.constant 0 : i32
    %c0_i32_1 = arith.constant 0 : i32
    return %arg0, %c0_i32, %c0_i32_0 : i32, i32, i32
  }
}

</mosaic_0001>

<llo_original>
// kernel: vision_embedding_forward.1
$region0: #{vision_embedding_forward.1}
  #allocation0 [shape = 'u32[]', space=smem, size = 0x4, offset = 0x4, fixed_abs, tag = 'smem constant byte address 0x4 - core index']
  #allocation1 [shape = 'u32[72,128]{1,0:T(1,128)}', space=vmem, size = 0x9000, scoped, tag = 'internal scratch']
  %s0 = inlined_call_operand.vmem [shape: bf16[2,24,128], index: 0, kind: input, shape index: {}]
  %s1 = inlined_call_operand.vmem [shape: bf16[128,128], index: 1, kind: input, shape index: {}]
  %s2 = inlined_call_operand.vmem [shape: f32[24,128], index: 2, kind: input, shape index: {}]
  %s3 = inlined_call_operand.vmem [shape: f32[2,17,128], index: 3, kind: output, shape index: {}]
  %s4 = sld [smem:[#allocation0]]
  $region45: #{vision_embedding_forward.1} parent=0
    _
  %s6 = ssub.s32 1, %s4
  %s7 = scalar_select 0, %s6, %s4
  loop: start=0, step=1, limit=4
  $region2: #{vision_embedding_forward.1} parent=0 // loop_pre_header
    _
  $region3: #{vision_embedding_forward.1} parent=0 // loop_header
    %s9 = sphi 0, %s13
    %p10 = scmp.ge.s32.totalorder %s9, 4
    %s19 = sphi 0, %s21
    %s22 = sphi 0, %s19
    %s23 = sphi 0, %s22
    %s39 = sphi 0, %s23
    %s43 = sphi 0, %s43
    %s45 = sphi 0, %s43
    %s46 = sphi 0, %s45
    %s60 = sphi 0, %s46
    %s64 = sphi 0, %s64
    %s66 = sphi 0, %s64
    %s67 = sphi 0, %s66
    %s81 = sphi 0, %s67
    %s87 = sphi 0, %s89
    %s90 = sphi 0, %s87
    %s91 = sphi 0, %s90
    %s107 = sphi 0, %s91
  $region4: #{vision_embedding_forward.1} parent=0 // loop_header_branch
    %12 = sbr.rel (%p10) target = $region8
  $region5: #{vision_embedding_forward.1} parent=0 // loop_body
    %s14 = ssub.s32 %s9, 1
    %s15 = ssub.s32 %s9, 2
    %s16 = sadd.s32 %s9, 1
    %s17 = ssub.s32 %s9, %s16
    %p18 = scmp.eq.s32.totalorder %s17, 0
    %s20 = sadd.s32 %s19, 1
    %s21 = scalar_select %p18, %s19, %s20
    %p24 = pneg %p18
    %p25 = scmp.eq.s32.totalorder %s9, 1
    %p26 = por %p24, %p25
    %p27 = scmp.ne.s32.totalorder %s19, %s22
    %p28 = scmp.eq.s32.totalorder %s9, 0
    %p29 = por %p27, %p28
    %p30 = scmp.ne.s32.totalorder %s19, %s22
    %p31 = scmp.eq.s32.totalorder %s14, 1
    %p32 = por %p30, %p31
    %p33 = scmp.ne.s32.totalorder %s22, %s23
    %p34 = scmp.eq.s32.totalorder %s14, 0
    %p35 = por %p33, %p34
    %p36 = scmp.ne.s32.totalorder %s22, %s23
    %p37 = scmp.eq.s32.totalorder %s15, 1
    %p38 = por %p36, %p37
    %p40 = scmp.ne.s32.totalorder %s23, %s39
    %p41 = scmp.eq.s32.totalorder %s15, 0
    %p42 = por %p40, %p41
    %s44 = sadd.s32 %s43, 1
    %p47 = scmp.eq.s32.totalorder %s9, 1
    %p48 = scmp.ne.s32.totalorder %s43, %s45
    %p49 = scmp.eq.s32.totalorder %s9, 0
    %p50 = por %p48, %p49
    %p51 = scmp.ne.s32.totalorder %s43, %s45
    %p52 = scmp.eq.s32.totalorder %s14, 1
    %p53 = por %p51, %p52
    %p54 = scmp.ne.s32.totalorder %s45, %s46
    %p55 = scmp.eq.s32.totalorder %s14, 0
    %p56 = por %p54, %p55
    %p57 = scmp.ne.s32.totalorder %s45, %s46
    %p58 = scmp.eq.s32.totalorder %s15, 1
    %p59 = por %p57, %p58
    %p61 = scmp.ne.s32.totalorder %s46, %s60
    %p62 = scmp.eq.s32.totalorder %s15, 0
    %p63 = por %p61, %p62
    %s65 = sadd.s32 %s64, 1
    %p68 = scmp.eq.s32.totalorder %s9, 1
    %p69 = scmp.ne.s32.totalorder %s64, %s66
    %p70 = scmp.eq.s32.totalorder %s9, 0
    %p71 = por %p69, %p70
    %p72 = scmp.ne.s32.totalorder %s64, %s66
    %p73 = scmp.eq.s32.totalorder %s14, 1
    %p74 = por %p72, %p73
    %p75 = scmp.ne.s32.totalorder %s66, %s67
    %p76 = scmp.eq.s32.totalorder %s14, 0
    %p77 = por %p75, %p76
    %p78 = scmp.ne.s32.totalorder %s66, %s67
    %p79 = scmp.eq.s32.totalorder %s15, 1
    %p80 = por %p78, %p79
    %p82 = scmp.ne.s32.totalorder %s67, %s81
    %p83 = scmp.eq.s32.totalorder %s15, 0
    %p84 = por %p82, %p83
    %s85 = ssub.s32 %s9, %s16
    %p86 = scmp.eq.s32.totalorder %s85, 0
    %s88 = sadd.s32 %s87, 1
    %s89 = scalar_select %p86, %s87, %s88
    %p92 = pneg %p86
    %p93 = scmp.eq.s32.totalorder %s9, 1
    %p94 = por %p92, %p93
    %p95 = scmp.ne.s32.totalorder %s87, %s90
    %p96 = scmp.eq.s32.totalorder %s9, 0
    %p97 = por %p95, %p96
    %p98 = scmp.ne.s32.totalorder %s87, %s90
    %p99 = scmp.eq.s32.totalorder %s14, 1
    %p100 = por %p98, %p99
    %p101 = scmp.ne.s32.totalorder %s90, %s91
    %p102 = scmp.eq.s32.totalorder %s14, 0
    %p103 = por %p101, %p102
    %p104 = scmp.ne.s32.totalorder %s90, %s91
    %p105 = scmp.eq.s32.totalorder %s15, 1
    %p106 = por %p104, %p105
    %p108 = scmp.ne.s32.totalorder %s91, %s107
    %p109 = scmp.eq.s32.totalorder %s15, 0
    %p110 = por %p108, %p109
    %p111 = scmp.le.s32.totalorder 1, %s9
    %p112 = scmp.lt.s32.totalorder %s9, 3
    %p113 = pnand %p111, %p112
    %p114 = pneg %p113
    // Predicated region
    $region9: #{vision_embedding_forward.1} parent=5 // pred_check
      _
    $region10: #{vision_embedding_forward.1} parent=5 // pred_check_branch
      %116 = sbr.rel (%p113) target = $region12
    $region11: #{vision_embedding_forward.1} parent=5 // pred_region
      %s117 = ssub.s32 %s9, 1
      // Predicated region
      $region13: #{vision_embedding_forward.1} parent=11 // pred_check
        %p118 = pneg %p56
      $region14: #{vision_embedding_forward.1} parent=11 // pred_check_branch
        %120 = sbr.rel (%p118) target = $region16
      $region15: #{vision_embedding_forward.1} parent=11 // pred_region
        _
      $region16: #{vision_embedding_forward.1} parent=11 // pred_fallthru
        _
      // Predicated region
      $region17: #{vision_embedding_forward.1} parent=11 // pred_check
        %p121 = pneg %p77
      $region18: #{vision_embedding_forward.1} parent=11 // pred_check_branch
        %123 = sbr.rel (%p121) target = $region20
      $region19: #{vision_embedding_forward.1} parent=11 // pred_region
        _
      $region20: #{vision_embedding_forward.1} parent=11 // pred_fallthru
        _
    $region12: #{vision_embedding_forward.1} parent=5 // pred_fallthru
      _
    %p124 = scmp.lt.s32.totalorder %s9, 2
    // Predicated region
    $region21: #{vision_embedding_forward.1} parent=5 // pred_check
      %p125 = pneg %p124
    $region22: #{vision_embedding_forward.1} parent=5 // pred_check_branch
      %127 = sbr.rel (%p125) target = $region24
    $region23: #{vision_embedding_forward.1} parent=5 // pred_region
      // Predicated region
      $region25: #{vision_embedding_forward.1} parent=23 // pred_check
        %p128 = pneg %p29
      $region26: #{vision_embedding_forward.1} parent=23 // pred_check_branch
        %130 = sbr.rel (%p128) target = $region28
      $region27: #{vision_embedding_forward.1} parent=23 // pred_region
        %p131 = scmp.lt.s32.totalorder %s9, 1
        %s132 = scalar_select %p131, %s9, 1
        %s133 = smul.addr %s132, 3
        %s134 = smul.addr %s133, 4
        %s135 = scalar_lea.vmem %s0, %s134
      $region28: #{vision_embedding_forward.1} parent=23 // pred_fallthru
        _
    $region24: #{vision_embedding_forward.1} parent=5 // pred_fallthru
      _
    %p136 = scmp.le.s32.totalorder 1, %s9
    %p137 = scmp.lt.s32.totalorder %s9, 3
    %p138 = pnand %p136, %p137
    %p139 = pneg %p138
    // Predicated region
    $region29: #{vision_embedding_forward.1} parent=5 // pred_check
      _
    $region30: #{vision_embedding_forward.1} parent=5 // pred_check_branch
      %141 = sbr.rel (%p138) target = $region32
    $region31: #{vision_embedding_forward.1} parent=5 // pred_region
      %s142 = ssub.s32 %s9, 1
      %p143 = scmp.lt.s32.totalorder %s14, 1
      %s144 = scalar_select %p143, %s14, 1
      %s145 = smul.addr %s144, 3
      %s146 = smul.addr %s145, 4
      %s147 = scalar_lea.vmem %s0, %s146
      %p148 = pneg %p35
      %p149 = pneg %p32
      %p150 = pneg %p56
      %p151 = pneg %p53
      %p152 = pneg %p77
      %p153 = pneg %p74
      %p154 = pneg %p103
      %p155 = pneg %p100
      %p156 = scmp.lt.s32.totalorder %s14, 1
      %s157 = scalar_select %p156, %s14, 1
      %s158 = smul.addr %s157, 3
      %s159 = smul.addr %s158, 8
      %s160 = scalar_lea.vmem %s3, %s159
      %p161 = scmp.lt.s32.totalorder %s14, 1
      %s162 = scalar_select %p161, %s14, 1
      %s163 = smul.addr %s162, 3
      %s164 = smul.addr %s163, 4
      %s165 = scalar_lea.vmem %s0, %s164
      %p166 = scmp.lt.s32.totalorder %s14, 1
      %s167 = scalar_select %p166, %s14, 1
      %s168 = smul.addr %s167, 3
      %s169 = smul.addr %s168, 8
      %s170 = scalar_lea.vmem %s3, %s169
      %v171 = vld [vmem:[%s165] sm:$0xf]
      %v172 = vld [vmem:[%s165 + $0x4] sm:$0xf]
      %v173 = vld [vmem:[%s165 + $0x8] sm:$0xf]
      %v174 = vld [vmem:[%s1] sm:$0xf]
      %v175 = vld [vmem:[%s1 + $0x4] sm:$0xf]
      %v176 = vld [vmem:[%s1 + $0x8] sm:$0xf]
      %v177 = vld [vmem:[%s1 + $0xc] sm:$0xf]
      %v178 = vld [vmem:[%s1 + $0x10] sm:$0xf]
      %v179 = vld [vmem:[%s1 + $0x14] sm:$0xf]
      %v180 = vld [vmem:[%s1 + $0x18] sm:$0xf]
      %v181 = vld [vmem:[%s1 + $0x1c] sm:$0xf]
      %v182 = vld [vmem:[%s1 + $0x20] sm:$0xf]
      %v183 = vld [vmem:[%s1 + $0x24] sm:$0xf]
      %v184 = vld [vmem:[%s1 + $0x28] sm:$0xf]
      %v185 = vld [vmem:[%s1 + $0x2c] sm:$0xf]
      %v186 = vld [vmem:[%s1 + $0x30] sm:$0xf]
      %v187 = vld [vmem:[%s1 + $0x34] sm:$0xf]
      %v188 = vld [vmem:[%s1 + $0x38] sm:$0xf]
      %v189 = vld [vmem:[%s1 + $0x3c] sm:$0xf]
      %v193 = vunpack.c.l.b16 %v171
      %v194 = vunpack.c.l.b16 %v172
      %v195 = vunpack.c.l.b16 %v173
      %v196 = vpack.c.b16 %v194, %v193
      %v197 = vpack.c.b16 %v195, %v195
      %v216 = vunpack.c.l.b16 %v174
      %v217 = vunpack.c.l.b16 %v175
      %v218 = vunpack.c.l.b16 %v176
      %v219 = vunpack.c.l.b16 %v177
      %v220 = vunpack.c.l.b16 %v178
      %v221 = vunpack.c.l.b16 %v179
      %v222 = vunpack.c.l.b16 %v180
      %v223 = vunpack.c.l.b16 %v181
      %v224 = vunpack.c.l.b16 %v182
      %v225 = vunpack.c.l.b16 %v183
      %v226 = vunpack.c.l.b16 %v184
      %v227 = vunpack.c.l.b16 %v185
      %v228 = vunpack.c.l.b16 %v186
      %v229 = vunpack.c.l.b16 %v187
      %v230 = vunpack.c.l.b16 %v188
      %v231 = vunpack.c.l.b16 %v189
      %v232 = vpack.c.b16 %v217, %v216
      %v233 = vpack.c.b16 %v219, %v218
      %v234 = vpack.c.b16 %v221, %v220
      %v235 = vpack.c.b16 %v223, %v222
      %v236 = vpack.c.b16 %v225, %v224
      %v237 = vpack.c.b16 %v227, %v226
      %v238 = vpack.c.b16 %v229, %v228
      %v239 = vpack.c.b16 %v231, %v230
      %248 = vmatpush.bf16.msra.mxu0 %v239
      %249 = vmatpush.bf16.msra.mxu0 %v238
      %250 = vmatpush.bf16.msra.mxu0 %v237
      %251 = vmatpush.bf16.msra.mxu0 %v236
      %252 = vmatpush.bf16.msra.mxu0 %v235
      %253 = vmatpush.bf16.msra.mxu0 %v234
      %254 = vmatpush.bf16.msra.mxu0 %v233
      %255 = vmatpush.bf16.msra.mxu0 %v232
      %256 = vmatmul.bf16.gmra.mxu0 %v196
      %v257 = vpop.f32.mrf.mxu0
      %v258 = vadd.f32 0.0, %v257
      %v259 = vpop.f32.mrf.mxu0
      %v260 = vadd.f32 0.0, %v259
      %261 = vmatmul.bf16.gmra.mxu0 %v197
      %v262 = vpop.f32.mrf.mxu0
      %v263 = vadd.f32 0.0, %v262
      %v264 = vpop.f32.mrf.mxu0
      %265 = vdwg.mxu0
      %v266 = vld [vmem:[%s2] sm:$0xff]
      %v267 = vld [vmem:[%s2 + $0x8] sm:$0xff]
      %v268 = vld [vmem:[%s2 + $0x10] sm:$0xff]
      %v269 = vadd.f32 %v258, %v266
      %v270 = vadd.f32 %v260, %v267
      %v271 = vadd.f32 %v263, %v268
      %272 = vst [vmem:[%s170] sm:$0xff] %v269
      %273 = vst [vmem:[%s170 + $0x8] sm:$0xff] %v270
      %274 = vst [vmem:[%s170 + $0x10] sm:$0x1] %v271
      %p275 = scmp.lt.s32.totalorder %s14, 1
      %s276 = scalar_select %p275, %s14, 1
      %s277 = smul.addr %s276, 3
      %s278 = smul.addr %s277, 8
      %s279 = scalar_lea.vmem %s3, %s278
      // Predicated region
      $region33: #{vision_embedding_forward.1} parent=31 // pred_check
        %p280 = pneg %p100
      $region34: #{vision_embedding_forward.1} parent=31 // pred_check_branch
        %282 = sbr.rel (%p280) target = $region36
      $region35: #{vision_embedding_forward.1} parent=31 // pred_region
        _
      $region36: #{vision_embedding_forward.1} parent=31 // pred_fallthru
        _
    $region32: #{vision_embedding_forward.1} parent=5 // pred_fallthru
      _
    %p283 = scmp.le.s32.totalorder 2, %s9
    // Predicated region
    $region37: #{vision_embedding_forward.1} parent=5 // pred_check
      %p284 = pneg %p283
    $region38: #{vision_embedding_forward.1} parent=5 // pred_check_branch
      %286 = sbr.rel (%p284) target = $region40
    $region39: #{vision_embedding_forward.1} parent=5 // pred_region
      %s287 = ssub.s32 %s9, 2
      // Predicated region
      $region41: #{vision_embedding_forward.1} parent=39 // pred_check
        %p288 = pneg %p106
      $region42: #{vision_embedding_forward.1} parent=39 // pred_check_branch
        %290 = sbr.rel (%p288) target = $region44
      $region43: #{vision_embedding_forward.1} parent=39 // pred_region
        %p291 = scmp.lt.s32.totalorder %s15, 1
        %s292 = scalar_select %p291, %s15, 1
        %s293 = smul.addr %s292, 3
        %s294 = smul.addr %s293, 8
        %s295 = scalar_lea.vmem %s3, %s294
      $region44: #{vision_embedding_forward.1} parent=39 // pred_fallthru
        _
    $region40: #{vision_embedding_forward.1} parent=5 // pred_fallthru
      _
  $region6: #{vision_embedding_forward.1} parent=0 // loop_footer
    %s13 = sadd.s32 1, %s9
  $region7: #{vision_embedding_forward.1} parent=0 // loop_footer_branch
    %8 = sbr.rel target = $region3
  $region8: #{vision_embedding_forward.1} parent=0 // loop_exit
    _

</llo_original>
